<compile_context>
chip_gen: v7x
topology: tpu7x:2x2x1
jax: 0.10.0
libtpu: 0.0.40
codegen_flags: <defaults>
</compile_context>

<pallas_src>
import functools

import jax
import jax.numpy as jnp
from jax import lax
from jax.experimental import pallas as pl
from jax.experimental.pallas import tpu as pltpu

_NEG = -1e30                      # finite "minus infinity" for masked lanes
_VMEM_LIMIT = 64 * 1024 * 1024    # explicit scoped-VMEM limit (>= v5e default)
_VMEM_BUDGET = 20 * 1024 * 1024   # conservative per-core working-set target


def _round_up(n, m):
    return (n + m - 1) // m * m


def _sublanes(dtype):
    # rows per vreg sublane group: 8 (f32), 16 (bf16), 32 (int8/fp8)
    return {4: 8, 2: 16, 1: 32}.get(jnp.dtype(dtype).itemsize, 8)


def _pick_row_tiling(n, row_tile, sub):
    """Choose a row tile that minimizes padding and keeps >=2 parallel tiles."""
    n_tiles = pl.cdiv(n, row_tile)
    if n_tiles == 1 and n >= 2 * sub:
        n_tiles = 2                      # let both v7x TensorCores get work
    tb = _round_up(pl.cdiv(n, n_tiles), sub)
    return tb, n_tiles * tb, n_tiles


def _shrink_row_tile(row_tile, sub, need_fn, budget=_VMEM_BUDGET):
    """Halve the row tile until the estimated VMEM working set fits."""
    while row_tile > sub and need_fn(row_tile) > budget:
        row_tile //= 2
    return max(row_tile, sub)


# ---------------------------------------------------------------------------
# Kernels
# ---------------------------------------------------------------------------

def _fused_linear_logsoftmax_kernel(x_ref, w_ref, b_ref, o_ref, *, n_classes):
    """Small-C path: W/b are whole-array VMEM residents, one pass per row tile."""
    logits = jnp.dot(x_ref[...], w_ref[...],
                     preferred_element_type=jnp.float32) + b_ref[...]
    col = lax.broadcasted_iota(jnp.int32, logits.shape, 1)
    logits = jnp.where(col < n_classes, logits, _NEG)   # mask padded classes
    m = jnp.max(logits, axis=-1, keepdims=True)
    shifted = logits - m
    lse = jnp.log(jnp.sum(jnp.exp(shifted), axis=-1, keepdims=True))
    o_ref[...] = (shifted - lse).astype(o_ref.dtype)


def _linear_streaming_lse_kernel(x_ref, w_ref, b_ref, logits_ref, lse_ref,
                                 m_sc, l_sc, *, n_classes, c_tile):
    """Large-C path: tiled matmul + online logsumexp across the C grid axis."""
    j = pl.program_id(1)

    @pl.when(j == 0)
    def _():
        m_sc[...] = jnp.full(m_sc.shape, _NEG, jnp.float32)
        l_sc[...] = jnp.zeros(l_sc.shape, jnp.float32)

    logits = jnp.dot(x_ref[...], w_ref[...],
                     preferred_element_type=jnp.float32) + b_ref[...]
    col = j * c_tile + lax.broadcasted_iota(jnp.int32, logits.shape, 1)
    logits = jnp.where(col < n_classes, logits, _NEG)   # mask padded classes
    logits_ref[...] = logits.astype(logits_ref.dtype)   # raw (masked) logits

    m_prev = m_sc[...]
    m_new = jnp.maximum(m_prev, jnp.max(logits, axis=-1, keepdims=True))
    l_sc[...] = (l_sc[...] * jnp.exp(m_prev - m_new)
                 + jnp.sum(jnp.exp(logits - m_new), axis=-1, keepdims=True))
    m_sc[...] = m_new

    @pl.when(j == pl.num_programs(1) - 1)
    def _():
        lse_ref[...] = m_sc[...] + jnp.log(l_sc[...])


def _subtract_lse_kernel(logits_ref, lse_ref, o_ref):
    """Normalization pass for the streaming path: log_softmax = logits - lse."""
    o_ref[...] = (logits_ref[...].astype(jnp.float32)
                  - lse_ref[...]).astype(o_ref.dtype)


def _fused_cls_kernel(counts_ref, x_ref, w_ref, b_ref, o_ref):
    """All CLS heads in one call; per-head valid class count from SMEM."""
    k = pl.program_id(0)
    logits = jnp.dot(x_ref[0], w_ref[0],
                     preferred_element_type=jnp.float32) + b_ref[0]
    col = lax.broadcasted_iota(jnp.int32, logits.shape, 1)
    logits = jnp.where(col < counts_ref[k], logits, _NEG)
    m = jnp.max(logits, axis=-1, keepdims=True)
    shifted = logits - m
    lse = jnp.log(jnp.sum(jnp.exp(shifted), axis=-1, keepdims=True))
    o_ref[0] = (shifted - lse).astype(o_ref.dtype)


# ---------------------------------------------------------------------------
# Wrappers
# ---------------------------------------------------------------------------

def _single_pass(x2d, weight, bias, c, row_tile, out_dtype):
    n, h = x2d.shape
    cpad = _round_up(c, 128)
    xb = jnp.dtype(x2d.dtype).itemsize
    wb = jnp.dtype(weight.dtype).itemsize
    ob = jnp.dtype(out_dtype).itemsize
    sub = _sublanes(x2d.dtype)

    # W/b are single-copy residents; x/out row tiles are double-buffered.
    row_tile = _shrink_row_tile(
        row_tile, sub,
        lambda t: h * cpad * wb + cpad * 4 + 2 * t * h * xb + 2 * t * cpad * ob)
    tb, npad, n_tiles = _pick_row_tiling(n, row_tile, sub)

    if npad != n:
        x2d = jnp.pad(x2d, ((0, npad - n), (0, 0)))
    w_p = jnp.pad(weight, ((0, 0), (0, cpad - c)))           # keep dtype (bf16 ok)
    b_p = jnp.pad(bias.astype(jnp.float32)[None, :], ((0, 0), (0, cpad - c)))

    out = pl.pallas_call(
        functools.partial(_fused_linear_logsoftmax_kernel, n_classes=c),
        out_shape=jax.ShapeDtypeStruct((npad, cpad), out_dtype),
        grid_spec=pltpu.PrefetchScalarGridSpec(
            num_scalar_prefetch=0,
            grid=(n_tiles,),
            in_specs=[
                pl.BlockSpec((tb, h), lambda i: (i, 0)),
                # grid-constant operands: whole-array VMEM residents
                # (one copy, one DMA - no double buffering).
                pl.BlockSpec(memory_space=pltpu.MemorySpace.VMEM),
                pl.BlockSpec(memory_space=pltpu.MemorySpace.VMEM),
            ],
            out_specs=pl.BlockSpec((tb, cpad), lambda i: (i, 0)),
        ),
        compiler_params=pltpu.CompilerParams(
            dimension_semantics=("parallel",),
            vmem_limit_bytes=_VMEM_LIMIT,
        ),
        cost_estimate=pl.CostEstimate(
            flops=2 * npad * h * cpad,
            transcendentals=npad * cpad + npad,
            bytes_accessed=(npad * h * xb + h * cpad * wb + cpad * 4
                            + npad * cpad * ob),
        ),
    )(x2d, w_p, b_p)
    return out[:n, :c]


def _streaming(x2d, weight, bias, c, row_tile, c_tile, out_dtype):
    n, h = x2d.shape
    xb = jnp.dtype(x2d.dtype).itemsize
    wb = jnp.dtype(weight.dtype).itemsize
    ob = jnp.dtype(out_dtype).itemsize
    sub = _sublanes(x2d.dtype)

    tc = min(_round_up(c_tile, 128), _round_up(c, 128))
    cpad = _round_up(c, tc)
    n_col = cpad // tc

    # Per-step VMEM: x tile + W tile + logits tile (double-buffered) + scratch.
    row_tile = _shrink_row_tile(
        row_tile, sub,
        lambda t: (2 * t * h * xb + 2 * h * tc * wb + 2 * t * tc * ob
                   + 2 * tc * 4 + 4 * t * 4))
    tb, npad, n_row = _pick_row_tiling(n, row_tile, sub)

    if npad != n:
        x2d = jnp.pad(x2d, ((0, npad - n), (0, 0)))
    w_p = jnp.pad(weight, ((0, 0), (0, cpad - c)))
    b_p = jnp.pad(bias.astype(jnp.float32)[None, :], ((0, 0), (0, cpad - c)))

    logits, lse = pl.pallas_call(
        functools.partial(_linear_streaming_lse_kernel, n_classes=c, c_tile=tc),
        out_shape=(jax.ShapeDtypeStruct((npad, cpad), out_dtype),
                   jax.ShapeDtypeStruct((npad, 1), jnp.float32)),
        grid_spec=pltpu.PrefetchScalarGridSpec(
            num_scalar_prefetch=0,
            grid=(n_row, n_col),                 # rows parallel, C innermost
            in_specs=[
                pl.BlockSpec((tb, h), lambda i, j: (i, 0)),   # x tile held over j
                pl.BlockSpec((h, tc), lambda i, j: (0, j)),   # W streamed over C
                pl.BlockSpec((1, tc), lambda i, j: (0, j)),
            ],
            out_specs=[
                pl.BlockSpec((tb, tc), lambda i, j: (i, j)),  # raw logits
                pl.BlockSpec((tb, 1), lambda i, j: (i, 0)),   # per-row LSE
            ],
            scratch_shapes=[pltpu.VMEM((tb, 1), jnp.float32),   # running max
                            pltpu.VMEM((tb, 1), jnp.float32)],  # running sumexp
        ),
        compiler_params=pltpu.CompilerParams(
            dimension_semantics=("parallel", "arbitrary"),
            vmem_limit_bytes=_VMEM_LIMIT,
        ),
        cost_estimate=pl.CostEstimate(
            flops=2 * npad * h * cpad,
            transcendentals=npad * cpad + npad,
            bytes_accessed=(npad * h * xb + n_row * h * cpad * wb
                            + n_row * cpad * 4 + npad * cpad * ob + npad * 4),
        ),
    )(x2d, w_p, b_p)

    out = pl.pallas_call(
        _subtract_lse_kernel,
        out_shape=jax.ShapeDtypeStruct((npad, cpad), out_dtype),
        grid_spec=pltpu.PrefetchScalarGridSpec(
            num_scalar_prefetch=0,
            grid=(n_row, n_col),
            in_specs=[
                pl.BlockSpec((tb, tc), lambda i, j: (i, j)),
                pl.BlockSpec((tb, 1), lambda i, j: (i, 0)),
            ],
            out_specs=pl.BlockSpec((tb, tc), lambda i, j: (i, j)),
        ),
        compiler_params=pltpu.CompilerParams(
            dimension_semantics=("parallel", "parallel"),
            vmem_limit_bytes=_VMEM_LIMIT,
        ),
        cost_estimate=pl.CostEstimate(
            flops=npad * cpad,
            transcendentals=0,
            bytes_accessed=2 * npad * cpad * ob + npad * 4,
        ),
    )(logits, lse)
    return out[:n, :c]


def linear_log_softmax(x2d, weight, bias, *, row_tile=256, c_tile=2048,
                       max_resident_classes=2048, out_dtype=None):
    """log_softmax(x2d @ weight + bias, axis=-1) with shape-adaptive tiling."""
    n, h = x2d.shape
    hw, c = weight.shape
    assert hw == h
    out_dtype = x2d.dtype if out_dtype is None else out_dtype
    if _round_up(c, 128) <= max_resident_classes:
        return _single_pass(x2d, weight, bias, c, row_tile, out_dtype)
    return _streaming(x2d, weight, bias, c, row_tile, c_tile, out_dtype)


def masked_language_model(x, weight, bias, **kw):
    """MaskedLanguageModel: log_softmax(Linear(x)) over every token."""
    b, s, h = x.shape
    out = linear_log_softmax(x.reshape(b * s, h), weight, bias, **kw)
    return out.reshape(b, s, -1)


def fused_cls_heads(xs, params_list, *, out_dtype=None):
    """NSP / NSP_MASK / BIG / GC in ONE pallas_call:
    log_softmax(Linear(x[:, 0])) per head; CLS slice/stacking done in XLA."""
    nheads = len(xs)
    b_sz, _, h = xs[0].shape
    out_dtype = xs[0].dtype if out_dtype is None else out_dtype
    sub = _sublanes(xs[0].dtype)
    bpad = _round_up(b_sz, sub)

    counts = [int(w.shape[1]) for (w, _) in params_list]
    cp = _round_up(max(counts), 128)

    x_stack = jnp.stack([jnp.pad(x[:, 0, :], ((0, bpad - b_sz), (0, 0)))
                         for x in xs])                               # (nh,Bp,H)
    w_stack = jnp.stack([jnp.pad(w, ((0, 0), (0, cp - w.shape[1])))
                         for (w, _) in params_list])                 # (nh,H,CP)
    b_stack = jnp.stack([jnp.pad(b.astype(jnp.float32)[None, :],
                                 ((0, 0), (0, cp - b.shape[0])))
                         for (_, b) in params_list])                 # (nh,1,CP)
    counts_arr = jnp.asarray(counts, jnp.int32)

    xb = jnp.dtype(x_stack.dtype).itemsize
    wb = jnp.dtype(w_stack.dtype).itemsize
    ob = jnp.dtype(out_dtype).itemsize

    out = pl.pallas_call(
        _fused_cls_kernel,
        out_shape=jax.ShapeDtypeStruct((nheads, bpad, cp), out_dtype),
        grid_spec=pltpu.PrefetchScalarGridSpec(
            num_scalar_prefetch=1,                 # per-head valid class counts
            grid=(nheads,),
            in_specs=[
                pl.BlockSpec((1, bpad, h), lambda k, cnt: (k, 0, 0)),
                pl.BlockSpec((1, h, cp), lambda k, cnt: (k, 0, 0)),
                pl.BlockSpec((1, 1, cp), lambda k, cnt: (k, 0, 0)),
            ],
            out_specs=pl.BlockSpec((1, bpad, cp), lambda k, cnt: (k, 0, 0)),
        ),
        compiler_params=pltpu.CompilerParams(
            dimension_semantics=("parallel",),
            vmem_limit_bytes=_VMEM_LIMIT,
        ),
        cost_estimate=pl.CostEstimate(
            flops=2 * nheads * bpad * h * cp,
            transcendentals=nheads * (bpad * cp + bpad),
            bytes_accessed=nheads * (bpad * h * xb + h * cp * wb + cp * 4
                                     + bpad * cp * ob) + nheads * 4,
        ),
    )(counts_arr, x_stack, w_stack, b_stack)

    return tuple(out[k, :b_sz, :counts[k]] for k in range(nheads))


def cls_head(x, weight, bias, **kw):
    """Single CLS-token head (kept for API parity)."""
    return linear_log_softmax(x[:, 0, :], weight, bias, **kw)


def bertlm_heads(c, c_mask, big_input, gc_input, params):
    """BERTLM forward (heads only), mirroring the PyTorch return tuple:
        (MLM(c_mask), NSP(c), NSP_MASK(c_mask), BIG(big_input), GC(gc_input))
    # TODO(synk): the BERT encoder (self.bert) is an external module not
    # defined in the spec; this consumes its hidden states directly.
    """
    mlm = masked_language_model(c_mask, *params["MLM"])
    nsp, nsp_mask, big, gc = fused_cls_heads(
        [c, c_mask, big_input, gc_input],
        [params["NSP"], params["NSP_MASK"], params["BIG"], params["GC"]])
    return mlm, nsp, nsp_mask, big, gc


# ----------------------------- demo / check --------------------------------

def _ref_head(x2d, weight, bias):
    return jax.nn.log_softmax(x2d @ weight + bias, axis=-1)


if __name__ == "__main__":
    key = jax.random.PRNGKey(0)
    keys = jax.random.split(key, 16)

    batch, seq, hidden = 2, 8, 32
    vocab_size = 320           # not a multiple of 128 -> exercises class masking
    graph_type_nums = 4        # len(OPTIMIZE_MAP)

    def make_linear(kw_, kb_, in_dim, out_dim):
        w = jax.random.normal(kw_, (in_dim, out_dim), jnp.float32) / jnp.sqrt(in_dim)
        b = jax.random.normal(kb_, (out_dim,), jnp.float32) * 0.1
        return w, b

    # Synthetic "BERT encoder outputs" for the four branches.
    c = jax.random.normal(keys[0], (batch, seq, hidden), jnp.float32)
    c_mask = jax.random.normal(keys[1], (batch, seq, hidden), jnp.float32)
    big_input = jax.random.normal(keys[2], (batch, seq, hidden), jnp.float32)
    gc_input = jax.random.normal(keys[3], (batch, seq, hidden), jnp.float32)

    params = {
        "MLM": make_linear(keys[4], keys[5], hidden, vocab_size),
        "NSP": make_linear(keys[6], keys[7], hidden, 2),
        "NSP_MASK": make_linear(keys[8], keys[9], hidden, 2),
        "BIG": make_linear(keys[10], keys[11], hidden, 2),
        "GC": make_linear(keys[12], keys[13], hidden, graph_type_nums),
    }

    outs = jax.block_until_ready(bertlm_heads(c, c_mask, big_input, gc_input, params))
    mlm, nsp, nsp_mask, big, gc = outs

    # References.
    ref_mlm = _ref_head(c_mask.reshape(-1, hidden), *params["MLM"]).reshape(
        batch, seq, vocab_size)
    ref_nsp = _ref_head(c[:, 0], *params["NSP"])
    ref_nsp_mask = _ref_head(c_mask[:, 0], *params["NSP_MASK"])
    ref_big = _ref_head(big_input[:, 0], *params["BIG"])
    ref_gc = _ref_head(gc_input[:, 0], *params["GC"])

    assert mlm.shape == (batch, seq, vocab_size)
    assert nsp.shape == (batch, 2) and nsp_mask.shape == (batch, 2)
    assert big.shape == (batch, 2) and gc.shape == (batch, graph_type_nums)

    for got, ref in [(mlm, ref_mlm), (nsp, ref_nsp), (nsp_mask, ref_nsp_mask),
                     (big, ref_big), (gc, ref_gc)]:
        assert jnp.allclose(got, ref, atol=1e-5, rtol=1e-5), "mismatch vs reference"

    # Also exercise + verify the tiled-C streaming-LSE path used for real
    # vocabularies (forced here with small tiles so it runs at toy shapes).
    mlm_stream = masked_language_model(c_mask, *params["MLM"],
                                       max_resident_classes=0,
                                       c_tile=128, row_tile=8)
    mlm_stream = jax.block_until_ready(mlm_stream)
    assert mlm_stream.shape == (batch, seq, vocab_size)
    assert jnp.allclose(mlm_stream, ref_mlm, atol=1e-5, rtol=1e-5), \
        "streaming-path mismatch vs reference"

    print("KERNEL_OK")
</pallas_src>

<mosaic_0001>
module attributes {stable_mosaic.version = 11 : i64} {
  func.func @_fused_linear_logsoftmax_kernel(%arg0: i32, %arg1: memref<8x32xf32, #tpu.memory_space<vmem>>, %arg2: memref<32x384xf32, #tpu.memory_space<vmem>>, %arg3: memref<1x384xf32, #tpu.memory_space<vmem>>, %arg4: memref<8x384xf32, #tpu.memory_space<vmem>>) attributes {dimension_semantics = [#tpu.dimension_semantics<parallel>], iteration_bounds = array<i64: 2>, scalar_prefetch = 0 : i64, scratch_operands = 0 : i64, tpu.core_type = #tpu.core_type<tc>, window_params = [{transform_indices = @transform_0, window_bounds = array<i64: 8, 32>}, {pipeline_mode = #tpu.pipeline_mode<synchronous>, transform_indices = @transform_1, window_bounds = array<i64: 32, 384>}, {pipeline_mode = #tpu.pipeline_mode<synchronous>, transform_indices = @transform_2, window_bounds = array<i64: 1, 384>}, {transform_indices = @transform_3, window_bounds = array<i64: 8, 384>}]} {
    %c0 = arith.constant 0 : index
    %c0_0 = arith.constant 0 : index
    %0 = vector.load %arg1[%c0, %c0_0] : memref<8x32xf32, #tpu.memory_space<vmem>>, vector<8x32xf32>
    %c0_1 = arith.constant 0 : index
    %c0_2 = arith.constant 0 : index
    %1 = vector.load %arg2[%c0_1, %c0_2] : memref<32x384xf32, #tpu.memory_space<vmem>>, vector<32x384xf32>
    %cst = arith.constant dense<0.000000e+00> : vector<8x384xf32>
    %2 = tpu.matmul %0, %1, %cst {dimension_numbers = #tpu.dot_dimension_numbers<[1], [0], [0], [1], [0, 0, 1, 1], [], []>} : vector<8x32xf32>, vector<32x384xf32>, vector<8x384xf32> -> vector<8x384xf32>
    %c0_3 = arith.constant 0 : index
    %c0_4 = arith.constant 0 : index
    %3 = vector.load %arg3[%c0_3, %c0_4] : memref<1x384xf32, #tpu.memory_space<vmem>>, vector<1x384xf32>
    %4 = vector.broadcast %3 : vector<1x384xf32> to vector<8x384xf32>
    %5 = arith.addf %2, %4 : vector<8x384xf32>
    %6 = tpu.iota {dimensions = array<i32: 1>} : vector<8x384xi32>
    %c320_i32 = arith.constant 320 : i32
    %7 = vector.broadcast %c320_i32 : i32 to vector<8x384xi32>
    %8 = arith.cmpi slt, %6, %7 : vector<8x384xi32>
    %cst_5 = arith.constant -1.000000e+30 : f32
    %9 = vector.broadcast %cst_5 : f32 to vector<8x384xf32>
    %10 = arith.select %8, %5, %9 : vector<8x384xi1>, vector<8x384xf32>
    %cst_6 = arith.constant dense<0xFF800000> : vector<8xf32>
    %11 = vector.multi_reduction <maximumf>, %10, %cst_6 [1] : vector<8x384xf32> to vector<8xf32>
    %12 = vector.shape_cast %11 : vector<8xf32> to vector<8x1xf32>
    %13 = vector.broadcast %12 : vector<8x1xf32> to vector<8x384xf32>
    %14 = arith.subf %10, %13 : vector<8x384xf32>
    %15 = math.exp %14 : vector<8x384xf32>
    %cst_7 = arith.constant dense<0.000000e+00> : vector<8xf32>
    %16 = vector.multi_reduction <add>, %15, %cst_7 [1] : vector<8x384xf32> to vector<8xf32>
    %17 = vector.shape_cast %16 : vector<8xf32> to vector<8x1xf32>
    %18 = math.log %17 : vector<8x1xf32>
    %19 = vector.broadcast %18 : vector<8x1xf32> to vector<8x384xf32>
    %20 = arith.subf %14, %19 : vector<8x384xf32>
    %c0_8 = arith.constant 0 : index
    %c0_9 = arith.constant 0 : index
    %21 = vector.load %arg4[%c0_8, %c0_9] : memref<8x384xf32, #tpu.memory_space<vmem>>, vector<8x384xf32>
    tpu.vector_store %arg4[%c0_8, %c0_9], %20 {strides = array<i32>} : memref<8x384xf32, #tpu.memory_space<vmem>>, vector<8x384xf32>,
    return
  }
  func.func @transform_0(%arg0: i32) -> (i32, i32) {
    %c0_i32 = arith.constant 0 : i32
    %c0_i32_0 = arith.constant 0 : i32
    return %arg0, %c0_i32 : i32, i32
  }
  func.func @transform_1(%arg0: i32) -> (i32, i32) {
    %c0_i32 = arith.constant 0 : i32
    %c0_i32_0 = arith.constant 0 : i32
    %c0_i32_1 = arith.constant 0 : i32
    return %c0_i32, %c0_i32_0 : i32, i32
  }
  func.func @transform_2(%arg0: i32) -> (i32, i32) {
    %c0_i32 = arith.constant 0 : i32
    %c0_i32_0 = arith.constant 0 : i32
    %c0_i32_1 = arith.constant 0 : i32
    return %c0_i32, %c0_i32_0 : i32, i32
  }
  func.func @transform_3(%arg0: i32) -> (i32, i32) {
    %c0_i32 = arith.constant 0 : i32
    %c0_i32_0 = arith.constant 0 : i32
    return %arg0, %c0_i32 : i32, i32
  }
}

</mosaic_0001>

<llo_original>
// kernel: tpu_custom_call.1
$region0: #{tpu_custom_call.1}
  #allocation0 [shape = 'u32[]', space=smem, size = 0x4, offset = 0x4, fixed_abs, tag = 'smem constant byte address 0x4 - core index']
  #allocation1 [shape = 'u32[144,128]{1,0:T(1,128)}', space=vmem, size = 0x12000, scoped, tag = 'internal scratch']
  %s0 = inlined_call_operand.hbm [shape: f32[16,32], index: 0, kind: input, shape index: {}]
  %s1 = inlined_call_operand.hbm [shape: f32[32,384], index: 1, kind: input, shape index: {}]
  %s2 = inlined_call_operand.hbm [shape: f32[1,384], index: 2, kind: input, shape index: {}]
  %s3 = inlined_call_operand.hbm [shape: f32[16,384], index: 3, kind: output, shape index: {}]
  %s4 = sld [smem:[#allocation0]]
  $region57: #{tpu_custom_call.1} parent=0
    _
  %s6 = ssub.s32 1, %s4
  %s7 = scalar_select 0, %s6, %s4
  $region1: #{tpu_custom_call.1} parent=0
    #allocation2 [shape = 'u8[8192]{0}', space=vmem, size = 0x2000, scoped, tag = 'input window, operand 0']
    #allocation3 [shape = 's32[2]{0}', space=sflag, size = 0x8, scoped, tag = 'scoped memory for tpu_custom_call.1']
    #allocation4 [shape = 's32[2]{0}', space=sflag, size = 0x8, scoped, tag = 'scoped memory for tpu_custom_call.1']
    #allocation5 [shape = 'u8[49152]{0}', space=vmem, size = 0xc000, scoped, tag = 'input window, operand 1, single buffered']
    #allocation6 [shape = 's32[1]{0}', space=sflag, size = 0x4, scoped, tag = 'scoped memory for tpu_custom_call.1']
    #allocation7 [shape = 'u8[1536]{0}', space=vmem, size = 0x800, scoped, tag = 'input window, operand 2, single buffered']
    #allocation8 [shape = 'u8[24576]{0}', space=vmem, size = 0x6000, scoped, tag = 'output window, operand 0']
    %8 = vsyncpa [#allocation3], 0
    %s9 = scalar_lea.sflag [#allocation3], 1
    %10 = vsyncpa %s9, 0
    %11 = vsyncpa [#allocation6], 0
    %12 = vsyncpa [#allocation4], 0
    %s13 = scalar_lea.sflag [#allocation4], 1
    %14 = vsyncpa %s13, 0
    loop: start=0, step=1, limit=4
    $region2: #{tpu_custom_call.1} parent=1 // loop_pre_header
      _
    $region3: #{tpu_custom_call.1} parent=1 // loop_header
      %s16 = sphi 0, %s20
      %p17 = scmp.ge.s32.totalorder %s16, 4
      %s26 = sphi 0, %s28
      %s29 = sphi 0, %s26
      %s30 = sphi 0, %s29
      %s46 = sphi 0, %s30
      %s50 = sphi 0, %s50
      %s52 = sphi 0, %s50
      %s53 = sphi 0, %s52
      %s67 = sphi 0, %s53
      %s71 = sphi 0, %s71
      %s73 = sphi 0, %s71
      %s74 = sphi 0, %s73
      %s88 = sphi 0, %s74
      %s94 = sphi 0, %s96
      %s97 = sphi 0, %s94
      %s98 = sphi 0, %s97
      %s114 = sphi 0, %s98
    $region4: #{tpu_custom_call.1} parent=1 // loop_header_branch
      %19 = sbr.rel (%p17) target = $region8
    $region5: #{tpu_custom_call.1} parent=1 // loop_body
      %s21 = ssub.s32 %s16, 1
      %s22 = ssub.s32 %s16, 2
      %s23 = sadd.s32 %s16, 1
      %s24 = ssub.s32 %s16, %s23
      %p25 = scmp.eq.s32.totalorder %s24, 0
      %s27 = sadd.s32 %s26, 1
      %s28 = scalar_select %p25, %s26, %s27
      %p31 = pneg %p25
      %p32 = scmp.eq.s32.totalorder %s16, 1
      %p33 = por %p31, %p32
      %p34 = scmp.ne.s32.totalorder %s26, %s29
      %p35 = scmp.eq.s32.totalorder %s16, 0
      %p36 = por %p34, %p35
      %p37 = scmp.ne.s32.totalorder %s26, %s29
      %p38 = scmp.eq.s32.totalorder %s21, 1
      %p39 = por %p37, %p38
      %p40 = scmp.ne.s32.totalorder %s29, %s30
      %p41 = scmp.eq.s32.totalorder %s21, 0
      %p42 = por %p40, %p41
      %p43 = scmp.ne.s32.totalorder %s29, %s30
      %p44 = scmp.eq.s32.totalorder %s22, 1
      %p45 = por %p43, %p44
      %p47 = scmp.ne.s32.totalorder %s30, %s46
      %p48 = scmp.eq.s32.totalorder %s22, 0
      %p49 = por %p47, %p48
      %s51 = sadd.s32 %s50, 1
      %p54 = scmp.eq.s32.totalorder %s16, 1
      %p55 = scmp.ne.s32.totalorder %s50, %s52
      %p56 = scmp.eq.s32.totalorder %s16, 0
      %p57 = por %p55, %p56
      %p58 = scmp.ne.s32.totalorder %s50, %s52
      %p59 = scmp.eq.s32.totalorder %s21, 1
      %p60 = por %p58, %p59
      %p61 = scmp.ne.s32.totalorder %s52, %s53
      %p62 = scmp.eq.s32.totalorder %s21, 0
      %p63 = por %p61, %p62
      %p64 = scmp.ne.s32.totalorder %s52, %s53
      %p65 = scmp.eq.s32.totalorder %s22, 1
      %p66 = por %p64, %p65
      %p68 = scmp.ne.s32.totalorder %s53, %s67
      %p69 = scmp.eq.s32.totalorder %s22, 0
      %p70 = por %p68, %p69
      %s72 = sadd.s32 %s71, 1
      %p75 = scmp.eq.s32.totalorder %s16, 1
      %p76 = scmp.ne.s32.totalorder %s71, %s73
      %p77 = scmp.eq.s32.totalorder %s16, 0
      %p78 = por %p76, %p77
      %p79 = scmp.ne.s32.totalorder %s71, %s73
      %p80 = scmp.eq.s32.totalorder %s21, 1
      %p81 = por %p79, %p80
      %p82 = scmp.ne.s32.totalorder %s73, %s74
      %p83 = scmp.eq.s32.totalorder %s21, 0
      %p84 = por %p82, %p83
      %p85 = scmp.ne.s32.totalorder %s73, %s74
      %p86 = scmp.eq.s32.totalorder %s22, 1
      %p87 = por %p85, %p86
      %p89 = scmp.ne.s32.totalorder %s74, %s88
      %p90 = scmp.eq.s32.totalorder %s22, 0
      %p91 = por %p89, %p90
      %s92 = ssub.s32 %s16, %s23
      %p93 = scmp.eq.s32.totalorder %s92, 0
      %s95 = sadd.s32 %s94, 1
      %s96 = scalar_select %p93, %s94, %s95
      %p99 = pneg %p93
      %p100 = scmp.eq.s32.totalorder %s16, 1
      %p101 = por %p99, %p100
      %p102 = scmp.ne.s32.totalorder %s94, %s97
      %p103 = scmp.eq.s32.totalorder %s16, 0
      %p104 = por %p102, %p103
      %p105 = scmp.ne.s32.totalorder %s94, %s97
      %p106 = scmp.eq.s32.totalorder %s21, 1
      %p107 = por %p105, %p106
      %p108 = scmp.ne.s32.totalorder %s97, %s98
      %p109 = scmp.eq.s32.totalorder %s21, 0
      %p110 = por %p108, %p109
      %p111 = scmp.ne.s32.totalorder %s97, %s98
      %p112 = scmp.eq.s32.totalorder %s22, 1
      %p113 = por %p111, %p112
      %p115 = scmp.ne.s32.totalorder %s98, %s114
      %p116 = scmp.eq.s32.totalorder %s22, 0
      %p117 = por %p115, %p116
      %p118 = scmp.le.s32.totalorder 1, %s16
      %p119 = scmp.lt.s32.totalorder %s16, 3
      %p120 = pnand %p118, %p119
      %p121 = pneg %p120
      // Predicated region
      $region9: #{tpu_custom_call.1} parent=5 // pred_check
        _
      $region10: #{tpu_custom_call.1} parent=5 // pred_check_branch
        %123 = sbr.rel (%p120) target = $region12
      $region11: #{tpu_custom_call.1} parent=5 // pred_region
        %s124 = ssub.s32 %s16, 1
        // Predicated region
        $region13: #{tpu_custom_call.1} parent=11 // pred_check
          %p125 = pneg %p63
        $region14: #{tpu_custom_call.1} parent=11 // pred_check_branch
          %127 = sbr.rel (%p125) target = $region16
        $region15: #{tpu_custom_call.1} parent=11 // pred_region
          %s129 = ssub.s32 1536, 1536
          %130 = vsyncadd [#allocation6], %s129
          %s131 = sshll.u32 [#allocation5], 4
          %s132 = int_to_ptr.vmem [resolvable:$true] %s131
          %137 = dma.hbm_to_vmem [thread:$0]  %s1, 1536, %s132, [#allocation6], 384, 384, 24
        $region16: #{tpu_custom_call.1} parent=11 // pred_fallthru
          _
        // Predicated region
        $region17: #{tpu_custom_call.1} parent=11 // pred_check
          %p138 = pneg %p84
        $region18: #{tpu_custom_call.1} parent=11 // pred_check_branch
          %140 = sbr.rel (%p138) target = $region20
        $region19: #{tpu_custom_call.1} parent=11 // pred_region
          %s142 = ssub.s32 48, 48
          %143 = vsyncadd [#allocation6], %s142
          %s145 = sshll.u32 [#allocation7], 4
          %s146 = int_to_ptr.vmem [resolvable:$true] %s145
          %148 = dma.hbm_to_vmem [thread:$0]  %s2, 48, %s146, [#allocation6]
        $region20: #{tpu_custom_call.1} parent=11 // pred_fallthru
          _
      $region12: #{tpu_custom_call.1} parent=5 // pred_fallthru
        _
      %p149 = scmp.lt.s32.totalorder %s16, 2
      // Predicated region
      $region21: #{tpu_custom_call.1} parent=5 // pred_check
        %p150 = pneg %p149
      $region22: #{tpu_custom_call.1} parent=5 // pred_check_branch
        %152 = sbr.rel (%p150) target = $region24
      $region23: #{tpu_custom_call.1} parent=5 // pred_region
        // Predicated region
        $region25: #{tpu_custom_call.1} parent=23 // pred_check
          %p153 = pneg %p36
        $region26: #{tpu_custom_call.1} parent=23 // pred_check_branch
          %155 = sbr.rel (%p153) target = $region28
        $region27: #{tpu_custom_call.1} parent=23 // pred_region
          %s156 = sand.u32 %s26, 1
          %s157 = scalar_lea.sflag [#allocation3], %s156
          %s158 = sand.u32 %s26, 1
          %s159 = smul.addr %s158, 8
          %s160 = scalar_lea.vmem [#allocation2], %s159
          %s162 = ssub.s32 128, 128
          %163 = vsyncadd %s157, %s162
          %s164 = smul.addr %s16, 128
          %s165 = scalar_lea.hbm %s0, %s164
          %s167 = sshll.u32 %s160, 4
          %s168 = int_to_ptr.vmem [resolvable:$true] %s167
          %170 = dma.hbm_to_vmem [thread:$0]  %s165, 128, %s168, %s157
        $region28: #{tpu_custom_call.1} parent=23 // pred_fallthru
          _
      $region24: #{tpu_custom_call.1} parent=5 // pred_fallthru
        _
      %p171 = scmp.le.s32.totalorder 1, %s16
      %p172 = scmp.lt.s32.totalorder %s16, 3
      %p173 = pnand %p171, %p172
      %p174 = pneg %p173
      // Predicated region
      $region29: #{tpu_custom_call.1} parent=5 // pred_check
        _
      $region30: #{tpu_custom_call.1} parent=5 // pred_check_branch
        %176 = sbr.rel (%p173) target = $region32
      $region31: #{tpu_custom_call.1} parent=5 // pred_region
        %s177 = ssub.s32 %s16, 1
        %s178 = sand.u32 %s29, 1
        %s179 = scalar_lea.sflag [#allocation3], %s178
        %s180 = sand.u32 %s29, 1
        %s181 = smul.addr %s180, 8
        %s182 = scalar_lea.vmem [#allocation2], %s181
        // Predicated region
        $region33: #{tpu_custom_call.1} parent=31 // pred_check
          %p183 = pneg %p42
        $region34: #{tpu_custom_call.1} parent=31 // pred_check_branch
          %185 = sbr.rel (%p183) target = $region36
        $region35: #{tpu_custom_call.1} parent=31 // pred_region
          %186 = dma.done %s179, 128
        $region36: #{tpu_custom_call.1} parent=31 // pred_fallthru
          _
        // Predicated region
        $region37: #{tpu_custom_call.1} parent=31 // pred_check
          %p187 = pneg %p63
        $region38: #{tpu_custom_call.1} parent=31 // pred_check_branch
          %189 = sbr.rel (%p187) target = $region40
        $region39: #{tpu_custom_call.1} parent=31 // pred_region
          %190 = dma.done [#allocation6], 1536
        $region40: #{tpu_custom_call.1} parent=31 // pred_fallthru
          _
        // Predicated region
        $region41: #{tpu_custom_call.1} parent=31 // pred_check
          %p191 = pneg %p84
        $region42: #{tpu_custom_call.1} parent=31 // pred_check_branch
          %193 = sbr.rel (%p191) target = $region44
        $region43: #{tpu_custom_call.1} parent=31 // pred_region
          %194 = dma.done [#allocation6], 48
        $region44: #{tpu_custom_call.1} parent=31 // pred_fallthru
          _
        %s195 = sand.u32 %s29, 1
        %s196 = scalar_lea.sflag [#allocation3], %s195
        %s197 = sand.u32 %s29, 1
        %s198 = smul.addr %s197, 8
        %s199 = scalar_lea.vmem [#allocation2], %s198
        %p200 = pneg %p42
        %p201 = pneg %p39
        %p202 = pneg %p63
        %p203 = pneg %p60
        %p204 = pneg %p84
        %p205 = pneg %p81
        %p206 = pneg %p110
        %p207 = pneg %p107
        %s208 = sand.u32 %s97, 1
        %s209 = scalar_lea.sflag [#allocation4], %s208
        %s210 = sand.u32 %s97, 1
        %s211 = smul.addr %s210, 24
        %s212 = scalar_lea.vmem [#allocation8], %s211
        %v213 = vld [vmem:[%s182] sm:$0xff]
        %v214 = vld [vmem:[#allocation5] sm:$0xff]
        %v215 = vld [vmem:[#allocation5 + $0x8] sm:$0xff]
        %v216 = vld [vmem:[#allocation5 + $0x10] sm:$0xff]
        %v217 = vld [vmem:[#allocation5 + $0x18] sm:$0xff]
        %v218 = vld [vmem:[#allocation5 + $0x20] sm:$0xff]
        %v219 = vld [vmem:[#allocation5 + $0x28] sm:$0xff]
        %v220 = vld [vmem:[#allocation5 + $0x30] sm:$0xff]
        %v221 = vld [vmem:[#allocation5 + $0x38] sm:$0xff]
        %v222 = vld [vmem:[#allocation5 + $0x40] sm:$0xff]
        %v223 = vld [vmem:[#allocation5 + $0x48] sm:$0xff]
        %v224 = vld [vmem:[#allocation5 + $0x50] sm:$0xff]
        %v225 = vld [vmem:[#allocation5 + $0x58] sm:$0xff]
        %v226 = vld [vmem:[#allocation7] sm:$0x7]
        %v228 = vlaneseq
        %v229 = vshrl.u32 %v228, 7
        %v230 = vsub.s32 0, %v229
        %v231 = vrot.slane %v226, %v230
        %v232 = vlaneseq
        %v233 = vshrl.u32 %v232, 7
        %v234 = vsub.s32 1, %v233
        %v235 = vrot.slane %v226, %v234
        %v236 = vlaneseq
        %v237 = vshrl.u32 %v236, 7
        %v238 = vsub.s32 2, %v237
        %v239 = vrot.slane %v226, %v238
        %vm243 = vcmask 261120
        %v245 = vsel %vm243, %v213, 0
        %247 = vmatprep.subr.mxu0 %v215
        %248 = vmatpush1.msra.mxu0 %v214
        %249 = vmatprep.subr.mxu0 %v218
        %250 = vmatpush1.msra.mxu0 %v217
        %251 = vmatprep.subr.mxu0 %v221
        %252 = vmatpush1.msra.mxu0 %v220
        %253 = vmatprep.subr.mxu0 %v224
        %254 = vmatpush1.msra.mxu0 %v223
        %255 = vmatprep.subr.mxu0 0.0
        %256 = vmatpush1.msra.mxu0 0.0
        %257 = vmatprep.subr.mxu0 0.0
        %258 = vmatpush1.msra.mxu0 0.0
        %259 = vmatprep.subr.mxu0 0.0
        %260 = vmatpush1.msra.mxu0 0.0
        %261 = vmatprep.subr.mxu0 0.0
        %262 = vmatpush1.msra.mxu0 0.0
        %263 = vmatprep.subr.mxu0 0.0
        %264 = vmatpush1.msra.mxu0 0.0
        %265 = vmatprep.subr.mxu0 0.0
        %266 = vmatpush1.msra.mxu0 0.0
        %267 = vmatprep.subr.mxu0 0.0
        %268 = vmatpush1.msra.mxu0 0.0
        %269 = vmatprep.subr.mxu0 0.0
        %270 = vmatpush1.msra.mxu0 0.0
        %271 = vmatprep.subr.mxu0 0.0
        %272 = vmatpush1.msra.mxu0 0.0
        %273 = vmatprep.subr.mxu0 0.0
        %274 = vmatpush1.msra.mxu0 0.0
        %275 = vmatprep.subr.mxu0 0.0
        %276 = vmatpush1.msra.mxu0 0.0
        %277 = vmatprep.subr.mxu0 0.0
        %278 = vmatpush1.msra.mxu0 0.0
        %279 = vmatprep.subr.mxu0 0.0
        %280 = vmatpush1.msra.mxu0 0.0
        %281 = vmatprep.subr.mxu0 0.0
        %282 = vmatpush1.msra.mxu0 0.0
        %283 = vmatprep.subr.mxu0 0.0
        %284 = vmatpush1.msra.mxu0 0.0
        %285 = vmatprep.subr.mxu0 0.0
        %286 = vmatpush1.msra.mxu0 0.0
        %287 = vmatprep.subr.mxu0 0.0
        %288 = vmatpush1.msra.mxu0 0.0
        %289 = vmatprep.subr.mxu0 0.0
        %290 = vmatpush1.msra.mxu0 0.0
        %291 = vmatprep.subr.mxu0 0.0
        %292 = vmatpush1.msra.mxu0 0.0
        %293 = vmatprep.subr.mxu0 0.0
        %294 = vmatpush1.msra.mxu0 0.0
        %295 = vmatprep.subr.mxu0 0.0
        %296 = vmatpush1.msra.mxu0 0.0
        %297 = vmatprep.subr.mxu0 0.0
        %298 = vmatpush1.msra.mxu0 0.0
        %299 = vmatprep.subr.mxu0 0.0
        %300 = vmatpush1.msra.mxu0 0.0
        %301 = vmatprep.subr.mxu0 0.0
        %302 = vmatpush1.msra.mxu0 0.0
        %303 = vmatprep.subr.mxu0 0.0
        %304 = vmatpush1.msra.mxu0 0.0
        %305 = vmatprep.subr.mxu0 0.0
        %306 = vmatpush1.msra.mxu0 0.0
        %307 = vmatprep.subr.mxu0 0.0
        %308 = vmatpush1.msra.mxu0 0.0
        %309 = vmatprep.subr.mxu0 0.0
        %310 = vmatpush1.msra.mxu0 0.0
        %311 = vmatprep.mubr.f32.mxu0 0.0
        %312 = vmatmul.mubr.f32.gmra.mrb[0].mxu0 %v245
        %v313 = vpop.f32.mrb[0].mxu0
        %v314 = vadd.f32 %v231, %v313
        %v315 = vpop.f32.mrb[0].mxu0
        %v316 = vadd.f32 %v235, %v315
        %317 = vdwg.mxu0
        %318 = vmatprep.subr.mxu0 0.0
        %319 = vmatpush1.msra.mxu0 %v216
        %320 = vmatprep.subr.mxu0 0.0
        %321 = vmatpush1.msra.mxu0 %v219
        %322 = vmatprep.subr.mxu0 0.0
        %323 = vmatpush1.msra.mxu0 %v222
        %324 = vmatprep.subr.mxu0 0.0
        %325 = vmatpush1.msra.mxu0 %v225
        %326 = vmatprep.subr.mxu0 0.0
        %327 = vmatpush1.msra.mxu0 0.0
        %328 = vmatprep.subr.mxu0 0.0
        %329 = vmatpush1.msra.mxu0 0.0
        %330 = vmatprep.subr.mxu0 0.0
        %331 = vmatpush1.msra.mxu0 0.0
        %332 = vmatprep.subr.mxu0 0.0
        %333 = vmatpush1.msra.mxu0 0.0
        %334 = vmatprep.subr.mxu0 0.0
        %335 = vmatpush1.msra.mxu0 0.0
        %336 = vmatprep.subr.mxu0 0.0
        %337 = vmatpush1.msra.mxu0 0.0
        %338 = vmatprep.subr.mxu0 0.0
        %339 = vmatpush1.msra.mxu0 0.0
        %340 = vmatprep.subr.mxu0 0.0
        %341 = vmatpush1.msra.mxu0 0.0
        %342 = vmatprep.subr.mxu0 0.0
        %343 = vmatpush1.msra.mxu0 0.0
        %344 = vmatprep.subr.mxu0 0.0
        %345 = vmatpush1.msra.mxu0 0.0
        %346 = vmatprep.subr.mxu0 0.0
        %347 = vmatpush1.msra.mxu0 0.0
        %348 = vmatprep.subr.mxu0 0.0
        %349 = vmatpush1.msra.mxu0 0.0
        %350 = vmatprep.subr.mxu0 0.0
        %351 = vmatpush1.msra.mxu0 0.0
        %352 = vmatprep.subr.mxu0 0.0
        %353 = vmatpush1.msra.mxu0 0.0
        %354 = vmatprep.subr.mxu0 0.0
        %355 = vmatpush1.msra.mxu0 0.0
        %356 = vmatprep.subr.mxu0 0.0
        %357 = vmatpush1.msra.mxu0 0.0
        %358 = vmatprep.subr.mxu0 0.0
        %359 = vmatpush1.msra.mxu0 0.0
        %360 = vmatprep.subr.mxu0 0.0
        %361 = vmatpush1.msra.mxu0 0.0
        %362 = vmatprep.subr.mxu0 0.0
        %363 = vmatpush1.msra.mxu0 0.0
        %364 = vmatprep.subr.mxu0 0.0
        %365 = vmatpush1.msra.mxu0 0.0
        %366 = vmatprep.subr.mxu0 0.0
        %367 = vmatpush1.msra.mxu0 0.0
        %368 = vmatprep.subr.mxu0 0.0
        %369 = vmatpush1.msra.mxu0 0.0
        %370 = vmatprep.subr.mxu0 0.0
        %371 = vmatpush1.msra.mxu0 0.0
        %372 = vmatprep.subr.mxu0 0.0
        %373 = vmatpush1.msra.mxu0 0.0
        %374 = vmatprep.subr.mxu0 0.0
        %375 = vmatpush1.msra.mxu0 0.0
        %376 = vmatprep.subr.mxu0 0.0
        %377 = vmatpush1.msra.mxu0 0.0
        %378 = vmatprep.subr.mxu0 0.0
        %379 = vmatpush1.msra.mxu0 0.0
        %380 = vmatprep.subr.mxu0 0.0
        %381 = vmatpush1.msra.mxu0 0.0
        %382 = vmatprep.mubr.f32.mxu0 0.0
        %383 = vmatmul.mubr.f32.gmra.mrb[0].mxu0 %v245
        %v384 = vpop.f32.mrb[0].mxu0
        %v385 = vadd.f32 %v239, %v384
        %v386 = vpop.f32.mrb[0].mxu0
        %387 = vdwg.mxu0
        %v388 = vlaneseq
        %v389 = vand.u32 %v388, 127
        %v390 = vadd.s32 %v389, 128
        %v391 = vadd.s32 %v389, 256
        %vm392 = vcmp.lt.s32.totalorder %v389, 320
        %vm393 = vcmp.lt.s32.totalorder %v390, 320
        %vm394 = vcmp.lt.s32.totalorder %v391, 320
        %v395 = vsel %vm392, %v314, -1e+30
        %v396 = vsel %vm393, %v316, -1e+30
        %v397 = vsel %vm394, %v385, -1e+30
        %v398 = vmax.f32 %v395, %v396
        %v399 = vmax.f32 %v398, %v397
        %400 = vmax.xlane.f32.xlu0 %v399
        %v401 = vpop.xlane.xlu0 %400
        %v402 = vsub.f32 %v395, %v401
        %v403 = vsub.f32 %v396, %v401
        %v404 = vsub.f32 %v397, %v401
        %v405 = vmul.f32 %v402, 1.442695
        %v406 = vpow.pop %v405
        %v407 = vmul.f32 %v403, 1.442695
        %v408 = vpow.pop %v407
        %v409 = vmul.f32 %v404, 1.442695
        %v410 = vpow.pop %v409
        %v411 = vadd.f32 %v406, %v408
        %v412 = vadd.f32 %v411, %v410
        %413 = vadd.xlane.f32.xlu0 %v412
        %v414 = vpop.xlane.xlu0 %413
        %v415 = vlog2.pop %v414
        %v416 = vmul.f32 %v415, 0.6931472
        %v417 = vsub.f32 %v402, %v416
        %v418 = vsub.f32 %v403, %v416
        %v419 = vsub.f32 %v404, %v416
        %420 = vst [vmem:[%s212] sm:$0xff] %v417
        %421 = vst [vmem:[%s212 + $0x8] sm:$0xff] %v418
        %422 = vst [vmem:[%s212 + $0x10] sm:$0xff] %v419
        %s423 = sand.u32 %s97, 1
        %s424 = scalar_lea.sflag [#allocation4], %s423
        %s425 = sand.u32 %s97, 1
        %s426 = smul.addr %s425, 24
        %s427 = scalar_lea.vmem [#allocation8], %s426
        // Predicated region
        $region45: #{tpu_custom_call.1} parent=31 // pred_check
          %p428 = pneg %p107
        $region46: #{tpu_custom_call.1} parent=31 // pred_check_branch
          %430 = sbr.rel (%p428) target = $region48
        $region47: #{tpu_custom_call.1} parent=31 // pred_region
          %s432 = ssub.s32 384, 384
          %433 = vsyncadd %s424, %s432
          %s434 = smul.addr %s21, 3
          %s435 = smul.addr %s434, 128
          %s436 = scalar_lea.hbm %s3, %s435
          %s438 = sshll.u32 %s427, 4
          %s439 = int_to_ptr.vmem [resolvable:$true] %s438
          %441 = dma.vmem_to_hbm [thread:$0]  %s439, 384, %s436, %s424
        $region48: #{tpu_custom_call.1} parent=31 // pred_fallthru
          _
      $region32: #{tpu_custom_call.1} parent=5 // pred_fallthru
        _
      %p442 = scmp.le.s32.totalorder 2, %s16
      // Predicated region
      $region49: #{tpu_custom_call.1} parent=5 // pred_check
        %p443 = pneg %p442
      $region50: #{tpu_custom_call.1} parent=5 // pred_check_branch
        %445 = sbr.rel (%p443) target = $region52
      $region51: #{tpu_custom_call.1} parent=5 // pred_region
        %s446 = ssub.s32 %s16, 2
        // Predicated region
        $region53: #{tpu_custom_call.1} parent=51 // pred_check
          %p447 = pneg %p113
        $region54: #{tpu_custom_call.1} parent=51 // pred_check_branch
          %449 = sbr.rel (%p447) target = $region56
        $region55: #{tpu_custom_call.1} parent=51 // pred_region
          %s450 = sand.u32 %s98, 1
          %s451 = scalar_lea.sflag [#allocation4], %s450
          %s452 = sand.u32 %s98, 1
          %s453 = smul.addr %s452, 24
          %s454 = scalar_lea.vmem [#allocation8], %s453
          %455 = dma.done %s451, 384
        $region56: #{tpu_custom_call.1} parent=51 // pred_fallthru
          _
      $region52: #{tpu_custom_call.1} parent=5 // pred_fallthru
        _
    $region6: #{tpu_custom_call.1} parent=1 // loop_footer
      %s20 = sadd.s32 1, %s16
    $region7: #{tpu_custom_call.1} parent=1 // loop_footer_branch
      %15 = sbr.rel target = $region3
    $region8: #{tpu_custom_call.1} parent=1 // loop_exit
      _
    %456 = vsyncpa [#allocation3], 1
    %s457 = scalar_lea.sflag [#allocation3], 1
    %458 = vsyncpa %s457, 1
    %459 = vsyncpa [#allocation6], 1
    %460 = vsyncpa [#allocation4], 1
    %s461 = scalar_lea.sflag [#allocation4], 1
    %462 = vsyncpa %s461, 1

</llo_original>
